<compile_context>
chip_gen: v5e
topology: v5e:2x2
jax: 0.10.0
libtpu: 0.0.40
codegen_flags: <defaults>
</compile_context>

<pallas_src>
import math

import jax
import jax.numpy as jnp
from jax.experimental import pallas as pl
from jax.experimental.pallas import tpu as pltpu


# -----------------------------------------------------------------------------
# Kernel body: out = w1 * cond + w2 * feat on one (tile_rows, lanes) VMEM tile.
# -----------------------------------------------------------------------------
def _weighted_add_kernel(w1_ref, w2_ref, cond_ref, feat_ref, out_ref):
    # w1_ref / w2_ref: (1, 1) float32 scalars in SMEM.
    # cond_ref / feat_ref / out_ref: (tile_rows, lanes) VMEM tiles.
    w1 = w1_ref[0, 0]
    w2 = w2_ref[0, 0]
    acc = (w1 * cond_ref[...].astype(jnp.float32)
           + w2 * feat_ref[...].astype(jnp.float32))
    out_ref[...] = acc.astype(out_ref.dtype)


_LANE_CANDIDATES = (2048, 1536, 1024, 768, 512, 384, 256, 128)
_MAX_TILE_BYTES = 4 << 20        # per-array, per-pipeline-buffer budget (~4 MiB)
_VMEM_LIMIT_BYTES = 32 << 20     # 3 arrays x 2 buffers x 4 MiB = 24 MiB + slack


def _pick_lanes(aligned_total):
    """Largest candidate lane width (multiple of 128) that divides the total."""
    for lanes in _LANE_CANDIDATES:
        if aligned_total % lanes == 0:
            return lanes
    return 128  # unreachable: aligned_total is a multiple of 128


def _round_up(x, m):
    return -(-x // m) * m


def _fused_2d(cond2d, feat2d, w1_arr, w2_arr, tile_rows):
    rows, lanes = cond2d.shape
    grid = (pl.cdiv(rows, tile_rows),)   # final block may overhang; Pallas masks it
    return pl.pallas_call(
        _weighted_add_kernel,
        out_shape=jax.ShapeDtypeStruct((rows, lanes), cond2d.dtype),
        grid_spec=pltpu.PrefetchScalarGridSpec(
            num_scalar_prefetch=0,
            grid=grid,
            in_specs=[
                pl.BlockSpec(memory_space=pltpu.SMEM),               # w1
                pl.BlockSpec(memory_space=pltpu.SMEM),               # w2
                pl.BlockSpec((tile_rows, lanes), lambda i: (i, 0)),  # cond
                pl.BlockSpec((tile_rows, lanes), lambda i: (i, 0)),  # feat
            ],
            out_specs=pl.BlockSpec((tile_rows, lanes), lambda i: (i, 0)),
        ),
        compiler_params=pltpu.CompilerParams(
            dimension_semantics=("parallel",),
            vmem_limit_bytes=_VMEM_LIMIT_BYTES,
        ),
    )(w1_arr, w2_arr, cond2d, feat2d)


def weighted_addition_fusion(feature_cond, feature, w1, w2):
    """w1 * feature_cond + w2 * feature via a tiled Pallas TPU kernel.

    feature_cond, feature: arrays of identical shape/dtype (e.g. NCHW).
    w1, w2: python floats / 0-d arrays (the module's learned fp32 scalars).
    """
    assert feature_cond.shape == feature.shape
    assert feature_cond.dtype == feature.dtype
    shape = feature_cond.shape
    dtype = feature_cond.dtype
    total = math.prod(shape)

    w1_f32 = jnp.asarray(w1, dtype=jnp.float32)
    w2_f32 = jnp.asarray(w2, dtype=jnp.float32)

    cond_flat = feature_cond.reshape(-1)
    feat_flat = feature.reshape(-1)

    aligned = (total // 128) * 128
    tail = total - aligned

    pieces = []
    if aligned:
        lanes = _pick_lanes(aligned)
        rows = aligned // lanes

        itemsize = jnp.dtype(dtype).itemsize
        # sublane granule: 8 rows for 32-bit, 16 for bf16, 32 for int8 packing
        sub = max(8, 32 // itemsize)
        max_tile_rows = max(sub,
                            (_MAX_TILE_BYTES // (lanes * itemsize)) // sub * sub)

        if rows <= sub:
            # Single block equal to the full array dims (always legal, tiny input).
            tile_rows = rows
        else:
            # Aim for >= 2 grid steps so the "parallel" axis can shard across
            # both v7x TensorCores, capped at the ~4 MiB-per-buffer budget.
            tile_rows = min(_round_up(-(-rows // 2), sub), max_tile_rows)

        cond2d = (cond_flat[:aligned] if tail else cond_flat).reshape(rows, lanes)
        feat2d = (feat_flat[:aligned] if tail else feat_flat).reshape(rows, lanes)

        out2d = _fused_2d(cond2d, feat2d,
                          w1_f32.reshape(1, 1), w2_f32.reshape(1, 1),
                          tile_rows)
        pieces.append(out2d.reshape(-1))

    if tail:
        # < 128-element ragged remainder: a masked kernel pass isn't worth it;
        # compute it with a trivial jnp expression on the suffix.
        tail_out = (w1_f32 * cond_flat[aligned:].astype(jnp.float32)
                    + w2_f32 * feat_flat[aligned:].astype(jnp.float32)
                    ).astype(dtype)
        pieces.append(tail_out)

    out_flat = pieces[0] if len(pieces) == 1 else jnp.concatenate(pieces)
    return out_flat.reshape(shape)


if __name__ == "__main__":
    # Deterministic parameter init per the module's __init__:
    #   weight1 = cond_ratio, weight2 = 1 - cond_ratio
    cond_ratio = 0.3
    w1 = cond_ratio
    w2 = 1.0 - cond_ratio

    key = jax.random.PRNGKey(0)
    k1, k2, k3, k4, k5, k6 = jax.random.split(key, 6)

    # Case 1: small NCHW, total a multiple of 128 -> zero-copy lane-dense path.
    fc1 = jax.random.normal(k1, (2, 4, 16, 16), dtype=jnp.float32)
    f1 = jax.random.normal(k2, (2, 4, 16, 16), dtype=jnp.float32)
    out1 = jax.block_until_ready(weighted_addition_fusion(fc1, f1, w1, w2))
    ref1 = w1 * fc1 + w2 * f1
    assert out1.shape == ref1.shape and out1.dtype == ref1.dtype
    assert jnp.allclose(out1, ref1, atol=1e-6, rtol=1e-6)

    # Case 2: odd spatial (7x7) -> total not a multiple of 128; kernel runs on the
    # aligned prefix, the <128-element tail is handled in jnp (no full-array pad).
    fc2 = jax.random.normal(k3, (2, 3, 7, 7), dtype=jnp.float32)
    f2 = jax.random.normal(k4, (2, 3, 7, 7), dtype=jnp.float32)
    out2 = jax.block_until_ready(weighted_addition_fusion(fc2, f2, w1, w2))
    ref2 = w1 * fc2 + w2 * f2
    assert out2.shape == ref2.shape and out2.dtype == ref2.dtype
    assert jnp.allclose(out2, ref2, atol=1e-6, rtol=1e-6)

    # Case 3: larger map -> exercises grid > 1 (multi-step pipeline + 2-way split).
    fc3 = jax.random.normal(k5, (2, 8, 64, 64), dtype=jnp.float32)
    f3 = jax.random.normal(k6, (2, 8, 64, 64), dtype=jnp.float32)
    out3 = jax.block_until_ready(weighted_addition_fusion(fc3, f3, w1, w2))
    ref3 = w1 * fc3 + w2 * f3
    assert out3.shape == ref3.shape and out3.dtype == ref3.dtype
    assert jnp.allclose(out3, ref3, atol=1e-6, rtol=1e-6)

    print("KERNEL_OK")
</pallas_src>

<mosaic_0001>
module attributes {stable_mosaic.version = 11 : i64} {
  func.func @_weighted_add_kernel(%arg0: i32, %arg1: memref<1x1xf32, #tpu.memory_space<smem>>, %arg2: memref<1x1xf32, #tpu.memory_space<smem>>, %arg3: memref<1x2048xf32, #tpu.memory_space<vmem>>, %arg4: memref<1x2048xf32, #tpu.memory_space<vmem>>, %arg5: memref<1x2048xf32, #tpu.memory_space<vmem>>) attributes {dimension_semantics = [#tpu.dimension_semantics<parallel>], iteration_bounds = array<i64: 1>, scalar_prefetch = 0 : i64, scratch_operands = 0 : i64, tpu.core_type = #tpu.core_type<tc>, window_params = [{transform_indices = @transform_0, window_bounds = array<i64: 1, 1>}, {transform_indices = @transform_1, window_bounds = array<i64: 1, 1>}, {transform_indices = @transform_2, window_bounds = array<i64: 1, 2048>}, {transform_indices = @transform_3, window_bounds = array<i64: 1, 2048>}, {transform_indices = @transform_4, window_bounds = array<i64: 1, 2048>}]} {
    %c0 = arith.constant 0 : index
    %c0_0 = arith.constant 0 : index
    %0 = memref.load %arg1[%c0, %c0_0] : memref<1x1xf32, #tpu.memory_space<smem>>
    %c0_1 = arith.constant 0 : index
    %c0_2 = arith.constant 0 : index
    %1 = memref.load %arg2[%c0_1, %c0_2] : memref<1x1xf32, #tpu.memory_space<smem>>
    %c0_3 = arith.constant 0 : index
    %c0_4 = arith.constant 0 : index
    %2 = vector.load %arg3[%c0_3, %c0_4] : memref<1x2048xf32, #tpu.memory_space<vmem>>, vector<1x2048xf32>
    %3 = vector.broadcast %0 : f32 to vector<1x2048xf32>
    %4 = arith.mulf %3, %2 : vector<1x2048xf32>
    %c0_5 = arith.constant 0 : index
    %c0_6 = arith.constant 0 : index
    %5 = vector.load %arg4[%c0_5, %c0_6] : memref<1x2048xf32, #tpu.memory_space<vmem>>, vector<1x2048xf32>
    %6 = vector.broadcast %1 : f32 to vector<1x2048xf32>
    %7 = arith.mulf %6, %5 : vector<1x2048xf32>
    %8 = arith.addf %4, %7 : vector<1x2048xf32>
    %c0_7 = arith.constant 0 : index
    %c0_8 = arith.constant 0 : index
    %9 = vector.load %arg5[%c0_7, %c0_8] : memref<1x2048xf32, #tpu.memory_space<vmem>>, vector<1x2048xf32>
    tpu.vector_store %arg5[%c0_7, %c0_8], %8 {strides = array<i32>} : memref<1x2048xf32, #tpu.memory_space<vmem>>, vector<1x2048xf32>,
    return
  }
  func.func @transform_0(%arg0: i32) -> (i32, i32) {
    %c0_i32 = arith.constant 0 : i32
    %c0_i32_0 = arith.constant 0 : i32
    %c0_i32_1 = arith.constant 0 : i32
    return %c0_i32, %c0_i32_0 : i32, i32
  }
  func.func @transform_1(%arg0: i32) -> (i32, i32) {
    %c0_i32 = arith.constant 0 : i32
    %c0_i32_0 = arith.constant 0 : i32
    %c0_i32_1 = arith.constant 0 : i32
    return %c0_i32, %c0_i32_0 : i32, i32
  }
  func.func @transform_2(%arg0: i32) -> (i32, i32) {
    %c0_i32 = arith.constant 0 : i32
    %c0_i32_0 = arith.constant 0 : i32
    return %arg0, %c0_i32 : i32, i32
  }
  func.func @transform_3(%arg0: i32) -> (i32, i32) {
    %c0_i32 = arith.constant 0 : i32
    %c0_i32_0 = arith.constant 0 : i32
    return %arg0, %c0_i32 : i32, i32
  }
  func.func @transform_4(%arg0: i32) -> (i32, i32) {
    %c0_i32 = arith.constant 0 : i32
    %c0_i32_0 = arith.constant 0 : i32
    return %arg0, %c0_i32 : i32, i32
  }
}

</mosaic_0001>

<llo_original>
// kernel: tpu_custom_call.1
$region0: #{tpu_custom_call.1}
  #allocation0 [shape = 'u32[]', space=smem, size = 0x4, offset = 0x4, fixed_abs, tag = 'smem constant byte address 0x4 - core index']
  #allocation1 [shape = 'u32[72,128]{1,0:T(1,128)}', space=vmem, size = 0x9000, scoped, tag = 'internal scratch']
  #allocation2 [shape = 'f32[1,1]{1,0:T(1,128)S(6)}', space=smem, size = 0x200, scoped, tag = 'scoped memory for tpu_custom_call.1']
  #allocation3 [shape = 'f32[1,1]{1,0:T(1,128)S(6)}', space=smem, size = 0x200, scoped, tag = 'scoped memory for tpu_custom_call.1']
  %s0 = inlined_call_operand.<no memory space> [shape: f32[1,1], index: 0, kind: input, shape index: {}]
  %s1 = inlined_call_operand.<no memory space> [shape: f32[1,1], index: 1, kind: input, shape index: {}]
  %s2 = inlined_call_operand.hbm [shape: f32[1,2048], index: 2, kind: input, shape index: {}]
  %s3 = inlined_call_operand.hbm [shape: f32[1,2048], index: 3, kind: input, shape index: {}]
  %s4 = inlined_call_operand.hbm [shape: f32[1,2048], index: 4, kind: output, shape index: {}]
  %s5 = sld [smem:[#allocation0]]
  $region34: #{tpu_custom_call.1} parent=0
    _
  %s7 = ssub.s32 1, %s5
  %s8 = scalar_select 0, %s7, %s5
  %9 = sst [smem:[#allocation2]] %s0
  %10 = sst [smem:[#allocation3]] %s1
  $region1: #{tpu_custom_call.1} parent=0
    #allocation4 [shape = 'u8[8192]{0}', space=vmem, size = 0x2000, scoped, tag = 'input window, operand 2, single buffered']
    #allocation5 [shape = 's32[1]{0}', space=sflag, size = 0x4, scoped, tag = 'scoped memory for tpu_custom_call.1']
    #allocation6 [shape = 's32[1]{0}', space=sflag, size = 0x4, scoped, tag = 'scoped memory for tpu_custom_call.1']
    #allocation7 [shape = 'u8[8192]{0}', space=vmem, size = 0x2000, scoped, tag = 'input window, operand 3, single buffered']
    #allocation8 [shape = 's32[1]{0}', space=sflag, size = 0x4, scoped, tag = 'scoped memory for tpu_custom_call.1']
    #allocation9 [shape = 'u8[8192]{0}', space=vmem, size = 0x2000, scoped, tag = 'output window, operand 0, single buffered']
    %11 = vsyncpa [#allocation5], 0
    %12 = vsyncpa [#allocation8], 0
    %13 = vsyncpa [#allocation6], 0
    // Predicated region
    $region2: #{tpu_custom_call.1} parent=1 // pred_check
      _
    $region3: #{tpu_custom_call.1} parent=1 // pred_check_branch
      %15 = sbr.rel (0) target = $region5
    $region4: #{tpu_custom_call.1} parent=1 // pred_region
      _
    $region5: #{tpu_custom_call.1} parent=1 // pred_fallthru
      _
    // Predicated region
    $region6: #{tpu_custom_call.1} parent=1 // pred_check
      _
    $region7: #{tpu_custom_call.1} parent=1 // pred_check_branch
      %17 = sbr.rel (0) target = $region9
    $region8: #{tpu_custom_call.1} parent=1 // pred_region
      _
    $region9: #{tpu_custom_call.1} parent=1 // pred_fallthru
      _
    // Predicated region
    $region10: #{tpu_custom_call.1} parent=1 // pred_check
      _
    $region11: #{tpu_custom_call.1} parent=1 // pred_check_branch
      %19 = sbr.rel (0) target = $region13
    $region12: #{tpu_custom_call.1} parent=1 // pred_region
      %21 = vsyncadd [#allocation5], 0
      %s23 = sshll.u32 %s2, 4
      %s24 = int_to_ptr.hbm [resolvable:$true] %s23
      %s25 = sshll.u32 [#allocation4], 4
      %s26 = int_to_ptr.vmem [resolvable:$true] %s25
      %28 = dma.hbm_to_vmem [thread:$0]  %s24, 256, %s26, [#allocation5]
    $region13: #{tpu_custom_call.1} parent=1 // pred_fallthru
      _
    // Predicated region
    $region14: #{tpu_custom_call.1} parent=1 // pred_check
      _
    $region15: #{tpu_custom_call.1} parent=1 // pred_check_branch
      %30 = sbr.rel (0) target = $region17
    $region16: #{tpu_custom_call.1} parent=1 // pred_region
      %32 = vsyncadd [#allocation8], 0
      %s34 = sshll.u32 %s3, 4
      %s35 = int_to_ptr.hbm [resolvable:$true] %s34
      %s36 = sshll.u32 [#allocation7], 4
      %s37 = int_to_ptr.vmem [resolvable:$true] %s36
      %39 = dma.hbm_to_vmem [thread:$0]  %s35, 256, %s37, [#allocation8]
    $region17: #{tpu_custom_call.1} parent=1 // pred_fallthru
      _
    // Predicated region
    $region18: #{tpu_custom_call.1} parent=1 // pred_check
      _
    $region19: #{tpu_custom_call.1} parent=1 // pred_check_branch
      %41 = sbr.rel (0) target = $region21
    $region20: #{tpu_custom_call.1} parent=1 // pred_region
      %43 = dma.done [#allocation5], 256
    $region21: #{tpu_custom_call.1} parent=1 // pred_fallthru
      _
    // Predicated region
    $region22: #{tpu_custom_call.1} parent=1 // pred_check
      _
    $region23: #{tpu_custom_call.1} parent=1 // pred_check_branch
      %45 = sbr.rel (0) target = $region25
    $region24: #{tpu_custom_call.1} parent=1 // pred_region
      %47 = dma.done [#allocation8], 256
    $region25: #{tpu_custom_call.1} parent=1 // pred_fallthru
      _
    %s48 = sld [smem:[#allocation2]]
    %s49 = sld [smem:[#allocation3]]
    %v50 = vld [vmem:[#allocation4] sm:$0xff]
    %v51 = vld [vmem:[#allocation4 + $0x8] sm:$0xff]
    %v52 = vstv %s48
    %v53 = vmul.f32 %v52, %v50
    %v54 = vmul.f32 %v52, %v51
    %v55 = vld [vmem:[#allocation7] sm:$0xff]
    %v56 = vld [vmem:[#allocation7 + $0x8] sm:$0xff]
    %v57 = vstv %s49
    %v58 = vmul.f32 %v57, %v55
    %v59 = vmul.f32 %v57, %v56
    %v60 = vadd.f32 %v53, %v58
    %v61 = vadd.f32 %v54, %v59
    %62 = vst [vmem:[#allocation9] sm:$0xff] %v60
    %63 = vst [vmem:[#allocation9 + $0x8] sm:$0xff] %v61
    // Predicated region
    $region26: #{tpu_custom_call.1} parent=1 // pred_check
      _
    $region27: #{tpu_custom_call.1} parent=1 // pred_check_branch
      %65 = sbr.rel (0) target = $region29
    $region28: #{tpu_custom_call.1} parent=1 // pred_region
      %67 = vsyncadd [#allocation6], 0
      %s69 = sshll.u32 [#allocation9], 4
      %s70 = int_to_ptr.vmem [resolvable:$true] %s69
      %s71 = sshll.u32 %s4, 4
      %s72 = int_to_ptr.hbm [resolvable:$true] %s71
      %74 = dma.vmem_to_hbm [thread:$0]  %s70, 256, %s72, [#allocation6]
    $region29: #{tpu_custom_call.1} parent=1 // pred_fallthru
      _
    // Predicated region
    $region30: #{tpu_custom_call.1} parent=1 // pred_check
      _
    $region31: #{tpu_custom_call.1} parent=1 // pred_check_branch
      %76 = sbr.rel (0) target = $region33
    $region32: #{tpu_custom_call.1} parent=1 // pred_region
      %78 = dma.done [#allocation6], 256
    $region33: #{tpu_custom_call.1} parent=1 // pred_fallthru
      _
    %79 = vsyncpa [#allocation5], 1
    %80 = vsyncpa [#allocation8], 1
    %81 = vsyncpa [#allocation6], 1

</llo_original>
